<compile_context>
chip_gen: v6e
topology: v6e:2x2x1
jax: 0.10.0
libtpu: 0.0.40
codegen_flags: <defaults>
</compile_context>

<pallas_src>
import jax
import jax.numpy as jnp
from jax.experimental import pallas as pl
from jax.experimental.pallas import tpu as pltpu

_LANES = 1024        # lane-dense column width (multiple of 128)
_MAX_BLOCK_ROWS = 512  # 512 x 1024 x 4B = 2 MiB per f32 block
_SUBLANE = 8


def _std_normal_from_uniform(u):
    """Inverse normal CDF (Acklam's rational approximation), u in (0,1)."""
    a0, a1, a2, a3, a4, a5 = (-3.969683028665376e+01, 2.209460984245205e+02,
                              -2.759285104469687e+02, 1.383577518672690e+02,
                              -3.066479806614716e+01, 2.506628277459239e+00)
    b0, b1, b2, b3, b4 = (-5.447609879822406e+01, 1.615858368580409e+02,
                          -1.556989798598866e+02, 6.680131188771972e+01,
                          -1.328068155288572e+01)
    c0, c1, c2, c3, c4, c5 = (-7.784894002430293e-03, -3.223964580411365e-01,
                              -2.400758277161838e+00, -2.549732539343734e+00,
                              4.374664141464968e+00, 2.938163982698783e+00)
    d0, d1, d2, d3 = (7.784695709041462e-03, 3.224671290700398e-01,
                      2.445134137142996e+00, 3.754408661907416e+00)
    p_low = 0.02425

    # Central region: rational polynomial in (u - 0.5).
    q = u - 0.5
    r = q * q
    num_c = (((((a0 * r + a1) * r + a2) * r + a3) * r + a4) * r + a5) * q
    den_c = ((((b0 * r + b1) * r + b2) * r + b3) * r + b4) * r + 1.0

    # Tails (symmetric via p_t = min(u, 1-u)); formula yields the (negative)
    # lower-tail quantile, flip the sign for the upper tail.
    p_t = jnp.minimum(u, 1.0 - u)
    qt = jnp.sqrt(-2.0 * jnp.log(p_t))
    num_t = ((((c0 * qt + c1) * qt + c2) * qt + c3) * qt + c4) * qt + c5
    den_t = (((d0 * qt + d1) * qt + d2) * qt + d3) * qt + 1.0
    sign = jnp.where(q < 0.0, 1.0, -1.0)

    central = p_t >= p_low
    num = jnp.where(central, num_c, sign * num_t)
    den = jnp.where(central, den_c, den_t)
    return num / den   # single divide per element


def _awgn_kernel(seed_ref, scale_ref, x_ref, o_ref):
    """o = x + scale * N(0,1), noise generated in-kernel.

    seed_ref : SMEM int32[1]
    scale_ref: SMEM float32[1]   (= sqrt(std/2))
    x_ref    : VMEM (br, C) block of the flattened input
    o_ref    : VMEM (br, C) output block
    """
    pid = pl.program_id(0)
    br, c = x_ref.shape

    # Unique global element index for this block -> i.i.d. noise per tile.
    row = jax.lax.broadcasted_iota(jnp.int32, (br, c), 0)
    col = jax.lax.broadcasted_iota(jnp.int32, (br, c), 1)
    idx = (pid * (br * c) + row * c + col).astype(jnp.uint32)

    seed = seed_ref[0].astype(jnp.uint32)

    # Counter-based hash (splitmix32-style finalizer) -> uniform 32-bit lanes.
    h = idx * jnp.uint32(0x9E3779B9) + seed * jnp.uint32(0x85EBCA6B) \
        + jnp.uint32(0x6A09E667)
    h = h ^ (h >> 16)
    h = h * jnp.uint32(0x7FEB352D)
    h = h ^ (h >> 15)
    h = h * jnp.uint32(0x846CA68B)
    h = h ^ (h >> 16)

    # Uniform in (0, 1): (23 mantissa bits + 0.5) * 2^-23.
    u = ((h >> 9).astype(jnp.int32).astype(jnp.float32) + 0.5) * (1.0 / (1 << 23))

    z = _std_normal_from_uniform(u)            # standard normal
    noise = scale_ref[0] * z

    o_ref[...] = (x_ref[...].astype(jnp.float32) + noise).astype(o_ref.dtype)


def channel_awgn_uniform(x, key, snr_low, snr_high):
    """Pallas equivalent of ChannelAWGN_uniform.forward(x)."""
    k_snr, k_seed = jax.random.split(key)

    # Sample SNR uniformly and derive noise std (mirrors the PyTorch module).
    snr = jax.random.uniform(k_snr, (), jnp.float32, snr_low, snr_high)
    std = 1.0 / (10.0 ** (snr / 10.0))
    scale = jnp.sqrt(std / 2.0).astype(jnp.float32).reshape(1)
    seed = jax.random.randint(k_seed, (1,), 0, jnp.iinfo(jnp.int32).max,
                              dtype=jnp.int32)

    orig_shape = x.shape
    orig_dtype = x.dtype
    total = x.size

    # Flatten to a lane-dense (rows, _LANES) slab; tile rows over a 1-D grid.
    c = _LANES
    rows_needed = -(-total // c)
    if rows_needed <= _MAX_BLOCK_ROWS:
        rows = max(_SUBLANE, ((rows_needed + _SUBLANE - 1) // _SUBLANE) * _SUBLANE)
        br = rows
    else:
        br = _MAX_BLOCK_ROWS
        rows = ((rows_needed + br - 1) // br) * br
    padded = rows * c

    x_flat = jnp.ravel(x)
    if padded != total:                     # skip the pad copy when possible
        x_flat = jnp.pad(x_flat, (0, padded - total))
    x2 = x_flat.reshape(rows, c)

    grid = (rows // br,)

    y2 = pl.pallas_call(
        _awgn_kernel,
        out_shape=jax.ShapeDtypeStruct((rows, c), orig_dtype),
        grid=grid,
        in_specs=[
            pl.BlockSpec(memory_space=pltpu.MemorySpace.SMEM),   # seed
            pl.BlockSpec(memory_space=pltpu.MemorySpace.SMEM),   # scale
            pl.BlockSpec((br, c), lambda i: (i, 0)),             # x block
        ],
        out_specs=pl.BlockSpec((br, c), lambda i: (i, 0)),
        compiler_params=pltpu.CompilerParams(
            dimension_semantics=("parallel",)),
    )(seed, scale, x2)

    if padded != total:
        y = y2.reshape(-1)[:total].reshape(orig_shape)
    else:
        y = y2.reshape(orig_shape)
    return y


if __name__ == "__main__":
    key = jax.random.PRNGKey(0)
    k_x, k_noise = jax.random.split(key)

    # Small NCHW input, consistent with a conv-style autoencoder feature map.
    x = jax.random.normal(k_x, (2, 4, 16, 16), dtype=jnp.float32)

    snr_low, snr_high = 0.0, 10.0
    y = channel_awgn_uniform(x, k_noise, snr_low, snr_high)
    y = jax.block_until_ready(y)

    assert y.shape == x.shape
    assert y.dtype == x.dtype
    assert bool(jnp.all(jnp.isfinite(y)))

    noise = y - x
    # Noise must be present and roughly the right magnitude:
    # snr in [0, 10] dB -> sigma = sqrt(10**(-snr/10)/2) in [0.224, 0.707].
    assert float(jnp.max(jnp.abs(noise))) > 0.0
    nstd = float(jnp.std(noise))
    nmean = float(jnp.mean(noise))
    assert 0.12 < nstd < 0.9, nstd
    assert abs(nmean) < 0.2, nmean

    print("KERNEL_OK")
</pallas_src>

<mosaic_0001>
module attributes {stable_mosaic.version = 11 : i64} {
  func.func @_awgn_kernel(%arg0: i32, %arg1: memref<1xi32, #tpu.memory_space<smem>>, %arg2: memref<1xf32, #tpu.memory_space<smem>>, %arg3: memref<8x1024xf32, #tpu.memory_space<vmem>>, %arg4: memref<8x1024xf32, #tpu.memory_space<vmem>>) attributes {dimension_semantics = [#tpu.dimension_semantics<parallel>], iteration_bounds = array<i64: 1>, scalar_prefetch = 0 : i64, scratch_operands = 0 : i64, tpu.core_type = #tpu.core_type<tc>, window_params = [{transform_indices = @transform_0, window_bounds = array<i64: 1>}, {transform_indices = @transform_1, window_bounds = array<i64: 1>}, {transform_indices = @transform_2, window_bounds = array<i64: 8, 1024>}, {transform_indices = @transform_3, window_bounds = array<i64: 8, 1024>}]} {
    %0 = tpu.iota {dimensions = array<i32: 0>} : vector<8x1024xi32>
    %1 = tpu.iota {dimensions = array<i32: 1>} : vector<8x1024xi32>
    %c8192_i32 = arith.constant 8192 : i32
    %2 = arith.muli %arg0, %c8192_i32 : i32
    %c1024_i32 = arith.constant 1024 : i32
    %3 = vector.broadcast %c1024_i32 : i32 to vector<8x1024xi32>
    %4 = arith.muli %0, %3 : vector<8x1024xi32>
    %5 = vector.broadcast %2 : i32 to vector<8x1024xi32>
    %6 = arith.addi %5, %4 : vector<8x1024xi32>
    %7 = arith.addi %6, %1 : vector<8x1024xi32>
    %c0 = arith.constant 0 : index
    %8 = memref.load %arg1[%c0] : memref<1xi32, #tpu.memory_space<smem>>
    %c-1640531527_i32 = arith.constant -1640531527 : i32
    %9 = vector.broadcast %c-1640531527_i32 : i32 to vector<8x1024xi32>
    %10 = arith.muli %7, %9 : vector<8x1024xi32>
    %c-2048144789_i32 = arith.constant -2048144789 : i32
    %11 = arith.muli %8, %c-2048144789_i32 : i32
    %12 = vector.broadcast %11 : i32 to vector<8x1024xi32>
    %13 = arith.addi %10, %12 : vector<8x1024xi32>
    %c1779033703_i32 = arith.constant 1779033703 : i32
    %14 = vector.broadcast %c1779033703_i32 : i32 to vector<8x1024xi32>
    %15 = arith.addi %13, %14 : vector<8x1024xi32>
    %c16_i32 = arith.constant 16 : i32
    %16 = vector.broadcast %c16_i32 : i32 to vector<8x1024xi32>
    %17 = arith.shrui %15, %16 : vector<8x1024xi32>
    %18 = arith.xori %15, %17 : vector<8x1024xi32>
    %c2146121005_i32 = arith.constant 2146121005 : i32
    %19 = vector.broadcast %c2146121005_i32 : i32 to vector<8x1024xi32>
    %20 = arith.muli %18, %19 : vector<8x1024xi32>
    %c15_i32 = arith.constant 15 : i32
    %21 = vector.broadcast %c15_i32 : i32 to vector<8x1024xi32>
    %22 = arith.shrui %20, %21 : vector<8x1024xi32>
    %23 = arith.xori %20, %22 : vector<8x1024xi32>
    %c-2073254261_i32 = arith.constant -2073254261 : i32
    %24 = vector.broadcast %c-2073254261_i32 : i32 to vector<8x1024xi32>
    %25 = arith.muli %23, %24 : vector<8x1024xi32>
    %c16_i32_0 = arith.constant 16 : i32
    %26 = vector.broadcast %c16_i32_0 : i32 to vector<8x1024xi32>
    %27 = arith.shrui %25, %26 : vector<8x1024xi32>
    %28 = arith.xori %25, %27 : vector<8x1024xi32>
    %c9_i32 = arith.constant 9 : i32
    %29 = vector.broadcast %c9_i32 : i32 to vector<8x1024xi32>
    %30 = arith.shrui %28, %29 : vector<8x1024xi32>
    %31 = arith.sitofp %30 : vector<8x1024xi32> to vector<8x1024xf32>
    %cst = arith.constant 5.000000e-01 : f32
    %32 = vector.broadcast %cst : f32 to vector<8x1024xf32>
    %33 = arith.addf %31, %32 : vector<8x1024xf32>
    %cst_1 = arith.constant 1.1920929E-7 : f32
    %34 = vector.broadcast %cst_1 : f32 to vector<8x1024xf32>
    %35 = arith.mulf %33, %34 : vector<8x1024xf32>
    %cst_2 = arith.constant 5.000000e-01 : f32
    %36 = vector.broadcast %cst_2 : f32 to vector<8x1024xf32>
    %37 = arith.subf %35, %36 : vector<8x1024xf32>
    %38 = arith.mulf %37, %37 : vector<8x1024xf32>
    %cst_3 = arith.constant -39.6968307 : f32
    %39 = vector.broadcast %cst_3 : f32 to vector<8x1024xf32>
    %40 = arith.mulf %39, %38 : vector<8x1024xf32>
    %cst_4 = arith.constant 220.946106 : f32
    %41 = vector.broadcast %cst_4 : f32 to vector<8x1024xf32>
    %42 = arith.addf %40, %41 : vector<8x1024xf32>
    %43 = arith.mulf %42, %38 : vector<8x1024xf32>
    %cst_5 = arith.constant -275.928497 : f32
    %44 = vector.broadcast %cst_5 : f32 to vector<8x1024xf32>
    %45 = arith.addf %43, %44 : vector<8x1024xf32>
    %46 = arith.mulf %45, %38 : vector<8x1024xf32>
    %cst_6 = arith.constant 138.357758 : f32
    %47 = vector.broadcast %cst_6 : f32 to vector<8x1024xf32>
    %48 = arith.addf %46, %47 : vector<8x1024xf32>
    %49 = arith.mulf %48, %38 : vector<8x1024xf32>
    %cst_7 = arith.constant -30.6647987 : f32
    %50 = vector.broadcast %cst_7 : f32 to vector<8x1024xf32>
    %51 = arith.addf %49, %50 : vector<8x1024xf32>
    %52 = arith.mulf %51, %38 : vector<8x1024xf32>
    %cst_8 = arith.constant 2.50662827 : f32
    %53 = vector.broadcast %cst_8 : f32 to vector<8x1024xf32>
    %54 = arith.addf %52, %53 : vector<8x1024xf32>
    %55 = arith.mulf %54, %37 : vector<8x1024xf32>
    %cst_9 = arith.constant -54.4760971 : f32
    %56 = vector.broadcast %cst_9 : f32 to vector<8x1024xf32>
    %57 = arith.mulf %56, %38 : vector<8x1024xf32>
    %cst_10 = arith.constant 161.585831 : f32
    %58 = vector.broadcast %cst_10 : f32 to vector<8x1024xf32>
    %59 = arith.addf %57, %58 : vector<8x1024xf32>
    %60 = arith.mulf %59, %38 : vector<8x1024xf32>
    %cst_11 = arith.constant -155.698975 : f32
    %61 = vector.broadcast %cst_11 : f32 to vector<8x1024xf32>
    %62 = arith.addf %60, %61 : vector<8x1024xf32>
    %63 = arith.mulf %62, %38 : vector<8x1024xf32>
    %cst_12 = arith.constant 66.8013153 : f32
    %64 = vector.broadcast %cst_12 : f32 to vector<8x1024xf32>
    %65 = arith.addf %63, %64 : vector<8x1024xf32>
    %66 = arith.mulf %65, %38 : vector<8x1024xf32>
    %cst_13 = arith.constant -13.2806816 : f32
    %67 = vector.broadcast %cst_13 : f32 to vector<8x1024xf32>
    %68 = arith.addf %66, %67 : vector<8x1024xf32>
    %69 = arith.mulf %68, %38 : vector<8x1024xf32>
    %cst_14 = arith.constant 1.000000e+00 : f32
    %70 = vector.broadcast %cst_14 : f32 to vector<8x1024xf32>
    %71 = arith.addf %69, %70 : vector<8x1024xf32>
    %cst_15 = arith.constant 1.000000e+00 : f32
    %72 = vector.broadcast %cst_15 : f32 to vector<8x1024xf32>
    %73 = arith.subf %72, %35 : vector<8x1024xf32>
    %74 = arith.minimumf %35, %73 : vector<8x1024xf32>
    %75 = math.log %74 : vector<8x1024xf32>
    %cst_16 = arith.constant -2.000000e+00 : f32
    %76 = vector.broadcast %cst_16 : f32 to vector<8x1024xf32>
    %77 = arith.mulf %76, %75 : vector<8x1024xf32>
    %78 = math.sqrt %77 : vector<8x1024xf32>
    %cst_17 = arith.constant -0.0077848942 : f32
    %79 = vector.broadcast %cst_17 : f32 to vector<8x1024xf32>
    %80 = arith.mulf %79, %78 : vector<8x1024xf32>
    %cst_18 = arith.constant -0.322396457 : f32
    %81 = vector.broadcast %cst_18 : f32 to vector<8x1024xf32>
    %82 = arith.addf %80, %81 : vector<8x1024xf32>
    %83 = arith.mulf %82, %78 : vector<8x1024xf32>
    %cst_19 = arith.constant -2.40075827 : f32
    %84 = vector.broadcast %cst_19 : f32 to vector<8x1024xf32>
    %85 = arith.addf %83, %84 : vector<8x1024xf32>
    %86 = arith.mulf %85, %78 : vector<8x1024xf32>
    %cst_20 = arith.constant -2.54973245 : f32
    %87 = vector.broadcast %cst_20 : f32 to vector<8x1024xf32>
    %88 = arith.addf %86, %87 : vector<8x1024xf32>
    %89 = arith.mulf %88, %78 : vector<8x1024xf32>
    %cst_21 = arith.constant 4.37466431 : f32
    %90 = vector.broadcast %cst_21 : f32 to vector<8x1024xf32>
    %91 = arith.addf %89, %90 : vector<8x1024xf32>
    %92 = arith.mulf %91, %78 : vector<8x1024xf32>
    %cst_22 = arith.constant 2.938164 : f32
    %93 = vector.broadcast %cst_22 : f32 to vector<8x1024xf32>
    %94 = arith.addf %92, %93 : vector<8x1024xf32>
    %cst_23 = arith.constant 0.00778469583 : f32
    %95 = vector.broadcast %cst_23 : f32 to vector<8x1024xf32>
    %96 = arith.mulf %95, %78 : vector<8x1024xf32>
    %cst_24 = arith.constant 0.322467119 : f32
    %97 = vector.broadcast %cst_24 : f32 to vector<8x1024xf32>
    %98 = arith.addf %96, %97 : vector<8x1024xf32>
    %99 = arith.mulf %98, %78 : vector<8x1024xf32>
    %cst_25 = arith.constant 2.44513416 : f32
    %100 = vector.broadcast %cst_25 : f32 to vector<8x1024xf32>
    %101 = arith.addf %99, %100 : vector<8x1024xf32>
    %102 = arith.mulf %101, %78 : vector<8x1024xf32>
    %cst_26 = arith.constant 3.7544086 : f32
    %103 = vector.broadcast %cst_26 : f32 to vector<8x1024xf32>
    %104 = arith.addf %102, %103 : vector<8x1024xf32>
    %105 = arith.mulf %104, %78 : vector<8x1024xf32>
    %cst_27 = arith.constant 1.000000e+00 : f32
    %106 = vector.broadcast %cst_27 : f32 to vector<8x1024xf32>
    %107 = arith.addf %105, %106 : vector<8x1024xf32>
    %cst_28 = arith.constant 0.000000e+00 : f32
    %108 = vector.broadcast %cst_28 : f32 to vector<8x1024xf32>
    %109 = arith.cmpf olt, %37, %108 : vector<8x1024xf32>
    %cst_29 = arith.constant 1.000000e+00 : f32
    %cst_30 = arith.constant -1.000000e+00 : f32
    %110 = vector.broadcast %cst_29 : f32 to vector<8x1024xf32>
    %111 = vector.broadcast %cst_30 : f32 to vector<8x1024xf32>
    %112 = arith.select %109, %110, %111 : vector<8x1024xi1>, vector<8x1024xf32>
    %cst_31 = arith.constant 2.425000e-02 : f32
    %113 = vector.broadcast %cst_31 : f32 to vector<8x1024xf32>
    %114 = arith.cmpf oge, %74, %113 : vector<8x1024xf32>
    %115 = arith.mulf %112, %94 : vector<8x1024xf32>
    %116 = arith.select %114, %55, %115 : vector<8x1024xi1>, vector<8x1024xf32>
    %117 = arith.select %114, %71, %107 : vector<8x1024xi1>, vector<8x1024xf32>
    %118 = arith.divf %116, %117 : vector<8x1024xf32>
    %c0_32 = arith.constant 0 : index
    %119 = memref.load %arg2[%c0_32] : memref<1xf32, #tpu.memory_space<smem>>
    %120 = vector.broadcast %119 : f32 to vector<8x1024xf32>
    %121 = arith.mulf %120, %118 : vector<8x1024xf32>
    %c0_33 = arith.constant 0 : index
    %c0_34 = arith.constant 0 : index
    %122 = vector.load %arg3[%c0_33, %c0_34] : memref<8x1024xf32, #tpu.memory_space<vmem>>, vector<8x1024xf32>
    %123 = arith.addf %122, %121 : vector<8x1024xf32>
    %c0_35 = arith.constant 0 : index
    %c0_36 = arith.constant 0 : index
    %124 = vector.load %arg4[%c0_35, %c0_36] : memref<8x1024xf32, #tpu.memory_space<vmem>>, vector<8x1024xf32>
    tpu.vector_store %arg4[%c0_35, %c0_36], %123 {strides = array<i32>} : memref<8x1024xf32, #tpu.memory_space<vmem>>, vector<8x1024xf32>,
    return
  }
  func.func @transform_0(%arg0: i32) -> i32 {
    %c0_i32 = arith.constant 0 : i32
    %c0_i32_0 = arith.constant 0 : i32
    return %c0_i32 : i32
  }
  func.func @transform_1(%arg0: i32) -> i32 {
    %c0_i32 = arith.constant 0 : i32
    %c0_i32_0 = arith.constant 0 : i32
    return %c0_i32 : i32
  }
  func.func @transform_2(%arg0: i32) -> (i32, i32) {
    %c0_i32 = arith.constant 0 : i32
    %c0_i32_0 = arith.constant 0 : i32
    return %arg0, %c0_i32 : i32, i32
  }
  func.func @transform_3(%arg0: i32) -> (i32, i32) {
    %c0_i32 = arith.constant 0 : i32
    %c0_i32_0 = arith.constant 0 : i32
    return %arg0, %c0_i32 : i32, i32
  }
}

</mosaic_0001>

<llo_original>
// kernel: tpu_custom_call.1
$region0: #{tpu_custom_call.1}
  #allocation0 [shape = 'u32[]', space=smem, size = 0x4, offset = 0x4, fixed_abs, tag = 'smem constant byte address 0x4 - core index']
  #allocation1 [shape = 'u32[144,128]{1,0:T(1,128)}', space=vmem, size = 0x12000, scoped, tag = 'internal scratch']
  #allocation2 [shape = 's32[1]{0:T(128)S(6)}', space=smem, size = 0x200, scoped, tag = 'scoped memory for tpu_custom_call.1']
  #allocation3 [shape = 'f32[1]{0:T(128)S(6)}', space=smem, size = 0x200, scoped, tag = 'scoped memory for tpu_custom_call.1']
  %s0 = inlined_call_operand.<no memory space> [shape: s32[1], index: 0, kind: input, shape index: {}]
  %s1 = inlined_call_operand.<no memory space> [shape: f32[1], index: 1, kind: input, shape index: {}]
  %s2 = inlined_call_operand.hbm [shape: f32[8,1024], index: 2, kind: input, shape index: {}]
  %s3 = inlined_call_operand.hbm [shape: f32[8,1024], index: 3, kind: output, shape index: {}]
  %s4 = sld [smem:[#allocation0]]
  $region26: #{tpu_custom_call.1} parent=0
    _
  %s6 = ssub.s32 1, %s4
  %s7 = scalar_select 0, %s6, %s4
  %8 = sst [smem:[#allocation2]] %s0
  %9 = sst [smem:[#allocation3]] %s1
  $region1: #{tpu_custom_call.1} parent=0
    #allocation4 [shape = 'u8[32768]{0}', space=vmem, size = 0x8000, scoped, tag = 'input window, operand 2, single buffered']
    #allocation5 [shape = 's32[1]{0}', space=sflag, size = 0x4, scoped, tag = 'scoped memory for tpu_custom_call.1']
    #allocation6 [shape = 's32[1]{0}', space=sflag, size = 0x4, scoped, tag = 'scoped memory for tpu_custom_call.1']
    #allocation7 [shape = 'u8[32768]{0}', space=vmem, size = 0x8000, scoped, tag = 'output window, operand 0, single buffered']
    %10 = vsyncpa [#allocation5], 0
    %11 = vsyncpa [#allocation6], 0
    // Predicated region
    $region2: #{tpu_custom_call.1} parent=1 // pred_check
      _
    $region3: #{tpu_custom_call.1} parent=1 // pred_check_branch
      %13 = sbr.rel (0) target = $region5
    $region4: #{tpu_custom_call.1} parent=1 // pred_region
      _
    $region5: #{tpu_custom_call.1} parent=1 // pred_fallthru
      _
    // Predicated region
    $region6: #{tpu_custom_call.1} parent=1 // pred_check
      _
    $region7: #{tpu_custom_call.1} parent=1 // pred_check_branch
      %15 = sbr.rel (0) target = $region9
    $region8: #{tpu_custom_call.1} parent=1 // pred_region
      _
    $region9: #{tpu_custom_call.1} parent=1 // pred_fallthru
      _
    // Predicated region
    $region10: #{tpu_custom_call.1} parent=1 // pred_check
      _
    $region11: #{tpu_custom_call.1} parent=1 // pred_check_branch
      %17 = sbr.rel (0) target = $region13
    $region12: #{tpu_custom_call.1} parent=1 // pred_region
      %s19 = ssub.s32 1024, 1024
      %20 = vsyncadd [#allocation5], %s19
      %s22 = sshll.u32 [#allocation4], 4
      %s23 = int_to_ptr.vmem [resolvable:$true] %s22
      %25 = dma.hbm_to_vmem [thread:$0]  %s2, 1024, %s23, [#allocation5]
    $region13: #{tpu_custom_call.1} parent=1 // pred_fallthru
      _
    // Predicated region
    $region14: #{tpu_custom_call.1} parent=1 // pred_check
      _
    $region15: #{tpu_custom_call.1} parent=1 // pred_check_branch
      %27 = sbr.rel (0) target = $region17
    $region16: #{tpu_custom_call.1} parent=1 // pred_region
      %28 = dma.done [#allocation5], 1024
    $region17: #{tpu_custom_call.1} parent=1 // pred_fallthru
      _
    %v29 = vlaneseq
    %v30 = vshrl.u32 %v29, 7
    %v31 = vlaneseq
    %v32 = vand.u32 %v31, 127
    %v33 = vadd.s32 %v32, 128
    %v34 = vadd.s32 %v32, 256
    %v35 = vadd.s32 %v32, 384
    %v36 = vadd.s32 %v32, 512
    %v37 = vadd.s32 %v32, 640
    %v38 = vadd.s32 %v32, 768
    %v39 = vadd.s32 %v32, 896
    %s40 = smul.u32 0, 8192
    %v41 = vmul.u32 %v30, 1024
    %v42 = vstv %s40
    %v43 = vadd.s32 %v42, %v41
    %v44 = vadd.s32 %v43, %v32
    %v45 = vadd.s32 %v43, %v33
    %v46 = vadd.s32 %v43, %v34
    %v47 = vadd.s32 %v43, %v35
    %v48 = vadd.s32 %v43, %v36
    %v49 = vadd.s32 %v43, %v37
    %v50 = vadd.s32 %v43, %v38
    %v51 = vadd.s32 %v43, %v39
    %s52 = sld [smem:[#allocation2]]
    %v53 = vmul.u32 %v44, 2654435769
    %v54 = vmul.u32 %v45, 2654435769
    %v55 = vmul.u32 %v46, 2654435769
    %v56 = vmul.u32 %v47, 2654435769
    %v57 = vmul.u32 %v48, 2654435769
    %v58 = vmul.u32 %v49, 2654435769
    %v59 = vmul.u32 %v50, 2654435769
    %v60 = vmul.u32 %v51, 2654435769
    %s61 = smul.u32 %s52, 2246822507
    %v62 = vstv %s61
    %v63 = vadd.s32 %v53, %v62
    %v64 = vadd.s32 %v54, %v62
    %v65 = vadd.s32 %v55, %v62
    %v66 = vadd.s32 %v56, %v62
    %v67 = vadd.s32 %v57, %v62
    %v68 = vadd.s32 %v58, %v62
    %v69 = vadd.s32 %v59, %v62
    %v70 = vadd.s32 %v60, %v62
    %v71 = vadd.s32 %v63, 1779033703
    %v72 = vadd.s32 %v64, 1779033703
    %v73 = vadd.s32 %v65, 1779033703
    %v74 = vadd.s32 %v66, 1779033703
    %v75 = vadd.s32 %v67, 1779033703
    %v76 = vadd.s32 %v68, 1779033703
    %v77 = vadd.s32 %v69, 1779033703
    %v78 = vadd.s32 %v70, 1779033703
    %v79 = vshrl.u32 %v71, 16
    %v80 = vshrl.u32 %v72, 16
    %v81 = vshrl.u32 %v73, 16
    %v82 = vshrl.u32 %v74, 16
    %v83 = vshrl.u32 %v75, 16
    %v84 = vshrl.u32 %v76, 16
    %v85 = vshrl.u32 %v77, 16
    %v86 = vshrl.u32 %v78, 16
    %v87 = vxor.u32 %v71, %v79
    %v88 = vxor.u32 %v72, %v80
    %v89 = vxor.u32 %v73, %v81
    %v90 = vxor.u32 %v74, %v82
    %v91 = vxor.u32 %v75, %v83
    %v92 = vxor.u32 %v76, %v84
    %v93 = vxor.u32 %v77, %v85
    %v94 = vxor.u32 %v78, %v86
    %v95 = vmul.u32 %v87, 2146121005
    %v96 = vmul.u32 %v88, 2146121005
    %v97 = vmul.u32 %v89, 2146121005
    %v98 = vmul.u32 %v90, 2146121005
    %v99 = vmul.u32 %v91, 2146121005
    %v100 = vmul.u32 %v92, 2146121005
    %v101 = vmul.u32 %v93, 2146121005
    %v102 = vmul.u32 %v94, 2146121005
    %v103 = vshrl.u32 %v95, 15
    %v104 = vshrl.u32 %v96, 15
    %v105 = vshrl.u32 %v97, 15
    %v106 = vshrl.u32 %v98, 15
    %v107 = vshrl.u32 %v99, 15
    %v108 = vshrl.u32 %v100, 15
    %v109 = vshrl.u32 %v101, 15
    %v110 = vshrl.u32 %v102, 15
    %v111 = vxor.u32 %v95, %v103
    %v112 = vxor.u32 %v96, %v104
    %v113 = vxor.u32 %v97, %v105
    %v114 = vxor.u32 %v98, %v106
    %v115 = vxor.u32 %v99, %v107
    %v116 = vxor.u32 %v100, %v108
    %v117 = vxor.u32 %v101, %v109
    %v118 = vxor.u32 %v102, %v110
    %v119 = vmul.u32 %v111, 2221713035
    %v120 = vmul.u32 %v112, 2221713035
    %v121 = vmul.u32 %v113, 2221713035
    %v122 = vmul.u32 %v114, 2221713035
    %v123 = vmul.u32 %v115, 2221713035
    %v124 = vmul.u32 %v116, 2221713035
    %v125 = vmul.u32 %v117, 2221713035
    %v126 = vmul.u32 %v118, 2221713035
    %v127 = vshrl.u32 %v119, 16
    %v128 = vshrl.u32 %v120, 16
    %v129 = vshrl.u32 %v121, 16
    %v130 = vshrl.u32 %v122, 16
    %v131 = vshrl.u32 %v123, 16
    %v132 = vshrl.u32 %v124, 16
    %v133 = vshrl.u32 %v125, 16
    %v134 = vshrl.u32 %v126, 16
    %v135 = vxor.u32 %v119, %v127
    %v136 = vxor.u32 %v120, %v128
    %v137 = vxor.u32 %v121, %v129
    %v138 = vxor.u32 %v122, %v130
    %v139 = vxor.u32 %v123, %v131
    %v140 = vxor.u32 %v124, %v132
    %v141 = vxor.u32 %v125, %v133
    %v142 = vxor.u32 %v126, %v134
    %v143 = vshrl.u32 %v135, 9
    %v144 = vshrl.u32 %v136, 9
    %v145 = vshrl.u32 %v137, 9
    %v146 = vshrl.u32 %v138, 9
    %v147 = vshrl.u32 %v139, 9
    %v148 = vshrl.u32 %v140, 9
    %v149 = vshrl.u32 %v141, 9
    %v150 = vshrl.u32 %v142, 9
    %v151 = vcvt.s32.f32 %v143
    %v152 = vcvt.s32.f32 %v144
    %v153 = vcvt.s32.f32 %v145
    %v154 = vcvt.s32.f32 %v146
    %v155 = vcvt.s32.f32 %v147
    %v156 = vcvt.s32.f32 %v148
    %v157 = vcvt.s32.f32 %v149
    %v158 = vcvt.s32.f32 %v150
    %v159 = vadd.f32 %v151, 0.5
    %v160 = vadd.f32 %v152, 0.5
    %v161 = vadd.f32 %v153, 0.5
    %v162 = vadd.f32 %v154, 0.5
    %v163 = vadd.f32 %v155, 0.5
    %v164 = vadd.f32 %v156, 0.5
    %v165 = vadd.f32 %v157, 0.5
    %v166 = vadd.f32 %v158, 0.5
    %v167 = vmul.f32 %v159, 1.1920929e-07
    %v168 = vmul.f32 %v160, 1.1920929e-07
    %v169 = vmul.f32 %v161, 1.1920929e-07
    %v170 = vmul.f32 %v162, 1.1920929e-07
    %v171 = vmul.f32 %v163, 1.1920929e-07
    %v172 = vmul.f32 %v164, 1.1920929e-07
    %v173 = vmul.f32 %v165, 1.1920929e-07
    %v174 = vmul.f32 %v166, 1.1920929e-07
    %v175 = vsub.f32 %v167, 0.5
    %v176 = vsub.f32 %v168, 0.5
    %v177 = vsub.f32 %v169, 0.5
    %v178 = vsub.f32 %v170, 0.5
    %v179 = vsub.f32 %v171, 0.5
    %v180 = vsub.f32 %v172, 0.5
    %v181 = vsub.f32 %v173, 0.5
    %v182 = vsub.f32 %v174, 0.5
    %v183 = vmul.f32 %v175, %v175
    %v184 = vmul.f32 %v176, %v176
    %v185 = vmul.f32 %v177, %v177
    %v186 = vmul.f32 %v178, %v178
    %v187 = vmul.f32 %v179, %v179
    %v188 = vmul.f32 %v180, %v180
    %v189 = vmul.f32 %v181, %v181
    %v190 = vmul.f32 %v182, %v182
    %v191 = vmul.f32 %v183, -39.69683
    %v192 = vmul.f32 %v184, -39.69683
    %v193 = vmul.f32 %v185, -39.69683
    %v194 = vmul.f32 %v186, -39.69683
    %v195 = vmul.f32 %v187, -39.69683
    %v196 = vmul.f32 %v188, -39.69683
    %v197 = vmul.f32 %v189, -39.69683
    %v198 = vmul.f32 %v190, -39.69683
    %v199 = vadd.f32 %v191, 220.9461
    %v200 = vadd.f32 %v192, 220.9461
    %v201 = vadd.f32 %v193, 220.9461
    %v202 = vadd.f32 %v194, 220.9461
    %v203 = vadd.f32 %v195, 220.9461
    %v204 = vadd.f32 %v196, 220.9461
    %v205 = vadd.f32 %v197, 220.9461
    %v206 = vadd.f32 %v198, 220.9461
    %v207 = vmul.f32 %v199, %v183
    %v208 = vmul.f32 %v200, %v184
    %v209 = vmul.f32 %v201, %v185
    %v210 = vmul.f32 %v202, %v186
    %v211 = vmul.f32 %v203, %v187
    %v212 = vmul.f32 %v204, %v188
    %v213 = vmul.f32 %v205, %v189
    %v214 = vmul.f32 %v206, %v190
    %v215 = vadd.f32 %v207, -275.9285
    %v216 = vadd.f32 %v208, -275.9285
    %v217 = vadd.f32 %v209, -275.9285
    %v218 = vadd.f32 %v210, -275.9285
    %v219 = vadd.f32 %v211, -275.9285
    %v220 = vadd.f32 %v212, -275.9285
    %v221 = vadd.f32 %v213, -275.9285
    %v222 = vadd.f32 %v214, -275.9285
    %v223 = vmul.f32 %v215, %v183
    %v224 = vmul.f32 %v216, %v184
    %v225 = vmul.f32 %v217, %v185
    %v226 = vmul.f32 %v218, %v186
    %v227 = vmul.f32 %v219, %v187
    %v228 = vmul.f32 %v220, %v188
    %v229 = vmul.f32 %v221, %v189
    %v230 = vmul.f32 %v222, %v190
    %v231 = vadd.f32 %v223, 138.35776
    %v232 = vadd.f32 %v224, 138.35776
    %v233 = vadd.f32 %v225, 138.35776
    %v234 = vadd.f32 %v226, 138.35776
    %v235 = vadd.f32 %v227, 138.35776
    %v236 = vadd.f32 %v228, 138.35776
    %v237 = vadd.f32 %v229, 138.35776
    %v238 = vadd.f32 %v230, 138.35776
    %v239 = vmul.f32 %v231, %v183
    %v240 = vmul.f32 %v232, %v184
    %v241 = vmul.f32 %v233, %v185
    %v242 = vmul.f32 %v234, %v186
    %v243 = vmul.f32 %v235, %v187
    %v244 = vmul.f32 %v236, %v188
    %v245 = vmul.f32 %v237, %v189
    %v246 = vmul.f32 %v238, %v190
    %v247 = vadd.f32 %v239, -30.664799
    %v248 = vadd.f32 %v240, -30.664799
    %v249 = vadd.f32 %v241, -30.664799
    %v250 = vadd.f32 %v242, -30.664799
    %v251 = vadd.f32 %v243, -30.664799
    %v252 = vadd.f32 %v244, -30.664799
    %v253 = vadd.f32 %v245, -30.664799
    %v254 = vadd.f32 %v246, -30.664799
    %v255 = vmul.f32 %v247, %v183
    %v256 = vmul.f32 %v248, %v184
    %v257 = vmul.f32 %v249, %v185
    %v258 = vmul.f32 %v250, %v186
    %v259 = vmul.f32 %v251, %v187
    %v260 = vmul.f32 %v252, %v188
    %v261 = vmul.f32 %v253, %v189
    %v262 = vmul.f32 %v254, %v190
    %v263 = vadd.f32 %v255, 2.5066283
    %v264 = vadd.f32 %v256, 2.5066283
    %v265 = vadd.f32 %v257, 2.5066283
    %v266 = vadd.f32 %v258, 2.5066283
    %v267 = vadd.f32 %v259, 2.5066283
    %v268 = vadd.f32 %v260, 2.5066283
    %v269 = vadd.f32 %v261, 2.5066283
    %v270 = vadd.f32 %v262, 2.5066283
    %v271 = vmul.f32 %v263, %v175
    %v272 = vmul.f32 %v264, %v176
    %v273 = vmul.f32 %v265, %v177
    %v274 = vmul.f32 %v266, %v178
    %v275 = vmul.f32 %v267, %v179
    %v276 = vmul.f32 %v268, %v180
    %v277 = vmul.f32 %v269, %v181
    %v278 = vmul.f32 %v270, %v182
    %v279 = vmul.f32 %v183, -54.476097
    %v280 = vmul.f32 %v184, -54.476097
    %v281 = vmul.f32 %v185, -54.476097
    %v282 = vmul.f32 %v186, -54.476097
    %v283 = vmul.f32 %v187, -54.476097
    %v284 = vmul.f32 %v188, -54.476097
    %v285 = vmul.f32 %v189, -54.476097
    %v286 = vmul.f32 %v190, -54.476097
    %v287 = vadd.f32 %v279, 161.58583
    %v288 = vadd.f32 %v280, 161.58583
    %v289 = vadd.f32 %v281, 161.58583
    %v290 = vadd.f32 %v282, 161.58583
    %v291 = vadd.f32 %v283, 161.58583
    %v292 = vadd.f32 %v284, 161.58583
    %v293 = vadd.f32 %v285, 161.58583
    %v294 = vadd.f32 %v286, 161.58583
    %v295 = vmul.f32 %v287, %v183
    %v296 = vmul.f32 %v288, %v184
    %v297 = vmul.f32 %v289, %v185
    %v298 = vmul.f32 %v290, %v186
    %v299 = vmul.f32 %v291, %v187
    %v300 = vmul.f32 %v292, %v188
    %v301 = vmul.f32 %v293, %v189
    %v302 = vmul.f32 %v294, %v190
    %v303 = vadd.f32 %v295, -155.69897
    %v304 = vadd.f32 %v296, -155.69897
    %v305 = vadd.f32 %v297, -155.69897
    %v306 = vadd.f32 %v298, -155.69897
    %v307 = vadd.f32 %v299, -155.69897
    %v308 = vadd.f32 %v300, -155.69897
    %v309 = vadd.f32 %v301, -155.69897
    %v310 = vadd.f32 %v302, -155.69897
    %v311 = vmul.f32 %v303, %v183
    %v312 = vmul.f32 %v304, %v184
    %v313 = vmul.f32 %v305, %v185
    %v314 = vmul.f32 %v306, %v186
    %v315 = vmul.f32 %v307, %v187
    %v316 = vmul.f32 %v308, %v188
    %v317 = vmul.f32 %v309, %v189
    %v318 = vmul.f32 %v310, %v190
    %v319 = vadd.f32 %v311, 66.801315
    %v320 = vadd.f32 %v312, 66.801315
    %v321 = vadd.f32 %v313, 66.801315
    %v322 = vadd.f32 %v314, 66.801315
    %v323 = vadd.f32 %v315, 66.801315
    %v324 = vadd.f32 %v316, 66.801315
    %v325 = vadd.f32 %v317, 66.801315
    %v326 = vadd.f32 %v318, 66.801315
    %v327 = vmul.f32 %v319, %v183
    %v328 = vmul.f32 %v320, %v184
    %v329 = vmul.f32 %v321, %v185
    %v330 = vmul.f32 %v322, %v186
    %v331 = vmul.f32 %v323, %v187
    %v332 = vmul.f32 %v324, %v188
    %v333 = vmul.f32 %v325, %v189
    %v334 = vmul.f32 %v326, %v190
    %v335 = vadd.f32 %v327, -13.280682
    %v336 = vadd.f32 %v328, -13.280682
    %v337 = vadd.f32 %v329, -13.280682
    %v338 = vadd.f32 %v330, -13.280682
    %v339 = vadd.f32 %v331, -13.280682
    %v340 = vadd.f32 %v332, -13.280682
    %v341 = vadd.f32 %v333, -13.280682
    %v342 = vadd.f32 %v334, -13.280682
    %v343 = vmul.f32 %v335, %v183
    %v344 = vmul.f32 %v336, %v184
    %v345 = vmul.f32 %v337, %v185
    %v346 = vmul.f32 %v338, %v186
    %v347 = vmul.f32 %v339, %v187
    %v348 = vmul.f32 %v340, %v188
    %v349 = vmul.f32 %v341, %v189
    %v350 = vmul.f32 %v342, %v190
    %v351 = vadd.f32 %v343, 1.0
    %v352 = vadd.f32 %v344, 1.0
    %v353 = vadd.f32 %v345, 1.0
    %v354 = vadd.f32 %v346, 1.0
    %v355 = vadd.f32 %v347, 1.0
    %v356 = vadd.f32 %v348, 1.0
    %v357 = vadd.f32 %v349, 1.0
    %v358 = vadd.f32 %v350, 1.0
    %v359 = vsub.f32 1.0, %v167
    %v360 = vsub.f32 1.0, %v168
    %v361 = vsub.f32 1.0, %v169
    %v362 = vsub.f32 1.0, %v170
    %v363 = vsub.f32 1.0, %v171
    %v364 = vsub.f32 1.0, %v172
    %v365 = vsub.f32 1.0, %v173
    %v366 = vsub.f32 1.0, %v174
    %v367 = vmin.f32 %v167, %v359
    %v368 = vmin.f32 %v168, %v360
    %v369 = vmin.f32 %v169, %v361
    %v370 = vmin.f32 %v170, %v362
    %v371 = vmin.f32 %v171, %v363
    %v372 = vmin.f32 %v172, %v364
    %v373 = vmin.f32 %v173, %v365
    %v374 = vmin.f32 %v174, %v366
    %v375 = vlog2.pop %v367
    %v376 = vmul.f32 %v375, 0.6931472
    %v377 = vlog2.pop %v368
    %v378 = vmul.f32 %v377, 0.6931472
    %v379 = vlog2.pop %v369
    %v380 = vmul.f32 %v379, 0.6931472
    %v381 = vlog2.pop %v370
    %v382 = vmul.f32 %v381, 0.6931472
    %v383 = vlog2.pop %v371
    %v384 = vmul.f32 %v383, 0.6931472
    %v385 = vlog2.pop %v372
    %v386 = vmul.f32 %v385, 0.6931472
    %v387 = vlog2.pop %v373
    %v388 = vmul.f32 %v387, 0.6931472
    %v389 = vlog2.pop %v374
    %v390 = vmul.f32 %v389, 0.6931472
    %v391 = vmul.f32 %v376, -2.0
    %v392 = vmul.f32 %v378, -2.0
    %v393 = vmul.f32 %v380, -2.0
    %v394 = vmul.f32 %v382, -2.0
    %v395 = vmul.f32 %v384, -2.0
    %v396 = vmul.f32 %v386, -2.0
    %v397 = vmul.f32 %v388, -2.0
    %v398 = vmul.f32 %v390, -2.0
    %v399 = vrsqrt.pop %v391
    %v400 = vmul.f32 %v391, %v399
    %vm401 = vcmp.eq.f32.partialorder %v391, inf
    %v402 = vsel %vm401, %v391, %v400
    %vm403 = vcmp.eq.f32.partialorder %v391, 0.0
    %v404 = vand.u32 %v391, 2147483648
    %v405 = vsel %vm403, %v404, %v402
    %v406 = vrsqrt.pop %v392
    %v407 = vmul.f32 %v392, %v406
    %vm408 = vcmp.eq.f32.partialorder %v392, inf
    %v409 = vsel %vm408, %v392, %v407
    %vm410 = vcmp.eq.f32.partialorder %v392, 0.0
    %v411 = vand.u32 %v392, 2147483648
    %v412 = vsel %vm410, %v411, %v409
    %v413 = vrsqrt.pop %v393
    %v414 = vmul.f32 %v393, %v413
    %vm415 = vcmp.eq.f32.partialorder %v393, inf
    %v416 = vsel %vm415, %v393, %v414
    %vm417 = vcmp.eq.f32.partialorder %v393, 0.0
    %v418 = vand.u32 %v393, 2147483648
    %v419 = vsel %vm417, %v418, %v416
    %v420 = vrsqrt.pop %v394
    %v421 = vmul.f32 %v394, %v420
    %vm422 = vcmp.eq.f32.partialorder %v394, inf
    %v423 = vsel %vm422, %v394, %v421
    %vm424 = vcmp.eq.f32.partialorder %v394, 0.0
    %v425 = vand.u32 %v394, 2147483648
    %v426 = vsel %vm424, %v425, %v423
    %v427 = vrsqrt.pop %v395
    %v428 = vmul.f32 %v395, %v427
    %vm429 = vcmp.eq.f32.partialorder %v395, inf
    %v430 = vsel %vm429, %v395, %v428
    %vm431 = vcmp.eq.f32.partialorder %v395, 0.0
    %v432 = vand.u32 %v395, 2147483648
    %v433 = vsel %vm431, %v432, %v430
    %v434 = vrsqrt.pop %v396
    %v435 = vmul.f32 %v396, %v434
    %vm436 = vcmp.eq.f32.partialorder %v396, inf
    %v437 = vsel %vm436, %v396, %v435
    %vm438 = vcmp.eq.f32.partialorder %v396, 0.0
    %v439 = vand.u32 %v396, 2147483648
    %v440 = vsel %vm438, %v439, %v437
    %v441 = vrsqrt.pop %v397
    %v442 = vmul.f32 %v397, %v441
    %vm443 = vcmp.eq.f32.partialorder %v397, inf
    %v444 = vsel %vm443, %v397, %v442
    %vm445 = vcmp.eq.f32.partialorder %v397, 0.0
    %v446 = vand.u32 %v397, 2147483648
    %v447 = vsel %vm445, %v446, %v444
    %v448 = vrsqrt.pop %v398
    %v449 = vmul.f32 %v398, %v448
    %vm450 = vcmp.eq.f32.partialorder %v398, inf
    %v451 = vsel %vm450, %v398, %v449
    %vm452 = vcmp.eq.f32.partialorder %v398, 0.0
    %v453 = vand.u32 %v398, 2147483648
    %v454 = vsel %vm452, %v453, %v451
    %v455 = vmul.f32 %v405, -0.007784894
    %v456 = vmul.f32 %v412, -0.007784894
    %v457 = vmul.f32 %v419, -0.007784894
    %v458 = vmul.f32 %v426, -0.007784894
    %v459 = vmul.f32 %v433, -0.007784894
    %v460 = vmul.f32 %v440, -0.007784894
    %v461 = vmul.f32 %v447, -0.007784894
    %v462 = vmul.f32 %v454, -0.007784894
    %v463 = vadd.f32 %v455, -0.32239646
    %v464 = vadd.f32 %v456, -0.32239646
    %v465 = vadd.f32 %v457, -0.32239646
    %v466 = vadd.f32 %v458, -0.32239646
    %v467 = vadd.f32 %v459, -0.32239646
    %v468 = vadd.f32 %v460, -0.32239646
    %v469 = vadd.f32 %v461, -0.32239646
    %v470 = vadd.f32 %v462, -0.32239646
    %v471 = vmul.f32 %v463, %v405
    %v472 = vmul.f32 %v464, %v412
    %v473 = vmul.f32 %v465, %v419
    %v474 = vmul.f32 %v466, %v426
    %v475 = vmul.f32 %v467, %v433
    %v476 = vmul.f32 %v468, %v440
    %v477 = vmul.f32 %v469, %v447
    %v478 = vmul.f32 %v470, %v454
    %v479 = vadd.f32 %v471, -2.4007583
    %v480 = vadd.f32 %v472, -2.4007583
    %v481 = vadd.f32 %v473, -2.4007583
    %v482 = vadd.f32 %v474, -2.4007583
    %v483 = vadd.f32 %v475, -2.4007583
    %v484 = vadd.f32 %v476, -2.4007583
    %v485 = vadd.f32 %v477, -2.4007583
    %v486 = vadd.f32 %v478, -2.4007583
    %v487 = vmul.f32 %v479, %v405
    %v488 = vmul.f32 %v480, %v412
    %v489 = vmul.f32 %v481, %v419
    %v490 = vmul.f32 %v482, %v426
    %v491 = vmul.f32 %v483, %v433
    %v492 = vmul.f32 %v484, %v440
    %v493 = vmul.f32 %v485, %v447
    %v494 = vmul.f32 %v486, %v454
    %v495 = vadd.f32 %v487, -2.5497324
    %v496 = vadd.f32 %v488, -2.5497324
    %v497 = vadd.f32 %v489, -2.5497324
    %v498 = vadd.f32 %v490, -2.5497324
    %v499 = vadd.f32 %v491, -2.5497324
    %v500 = vadd.f32 %v492, -2.5497324
    %v501 = vadd.f32 %v493, -2.5497324
    %v502 = vadd.f32 %v494, -2.5497324
    %v503 = vmul.f32 %v495, %v405
    %v504 = vmul.f32 %v496, %v412
    %v505 = vmul.f32 %v497, %v419
    %v506 = vmul.f32 %v498, %v426
    %v507 = vmul.f32 %v499, %v433
    %v508 = vmul.f32 %v500, %v440
    %v509 = vmul.f32 %v501, %v447
    %v510 = vmul.f32 %v502, %v454
    %v511 = vadd.f32 %v503, 4.3746643
    %v512 = vadd.f32 %v504, 4.3746643
    %v513 = vadd.f32 %v505, 4.3746643
    %v514 = vadd.f32 %v506, 4.3746643
    %v515 = vadd.f32 %v507, 4.3746643
    %v516 = vadd.f32 %v508, 4.3746643
    %v517 = vadd.f32 %v509, 4.3746643
    %v518 = vadd.f32 %v510, 4.3746643
    %v519 = vmul.f32 %v511, %v405
    %v520 = vmul.f32 %v512, %v412
    %v521 = vmul.f32 %v513, %v419
    %v522 = vmul.f32 %v514, %v426
    %v523 = vmul.f32 %v515, %v433
    %v524 = vmul.f32 %v516, %v440
    %v525 = vmul.f32 %v517, %v447
    %v526 = vmul.f32 %v518, %v454
    %v527 = vadd.f32 %v519, 2.938164
    %v528 = vadd.f32 %v520, 2.938164
    %v529 = vadd.f32 %v521, 2.938164
    %v530 = vadd.f32 %v522, 2.938164
    %v531 = vadd.f32 %v523, 2.938164
    %v532 = vadd.f32 %v524, 2.938164
    %v533 = vadd.f32 %v525, 2.938164
    %v534 = vadd.f32 %v526, 2.938164
    %v535 = vmul.f32 %v405, 0.007784696
    %v536 = vmul.f32 %v412, 0.007784696
    %v537 = vmul.f32 %v419, 0.007784696
    %v538 = vmul.f32 %v426, 0.007784696
    %v539 = vmul.f32 %v433, 0.007784696
    %v540 = vmul.f32 %v440, 0.007784696
    %v541 = vmul.f32 %v447, 0.007784696
    %v542 = vmul.f32 %v454, 0.007784696
    %v543 = vadd.f32 %v535, 0.32246712
    %v544 = vadd.f32 %v536, 0.32246712
    %v545 = vadd.f32 %v537, 0.32246712
    %v546 = vadd.f32 %v538, 0.32246712
    %v547 = vadd.f32 %v539, 0.32246712
    %v548 = vadd.f32 %v540, 0.32246712
    %v549 = vadd.f32 %v541, 0.32246712
    %v550 = vadd.f32 %v542, 0.32246712
    %v551 = vmul.f32 %v543, %v405
    %v552 = vmul.f32 %v544, %v412
    %v553 = vmul.f32 %v545, %v419
    %v554 = vmul.f32 %v546, %v426
    %v555 = vmul.f32 %v547, %v433
    %v556 = vmul.f32 %v548, %v440
    %v557 = vmul.f32 %v549, %v447
    %v558 = vmul.f32 %v550, %v454
    %v559 = vadd.f32 %v551, 2.4451342
    %v560 = vadd.f32 %v552, 2.4451342
    %v561 = vadd.f32 %v553, 2.4451342
    %v562 = vadd.f32 %v554, 2.4451342
    %v563 = vadd.f32 %v555, 2.4451342
    %v564 = vadd.f32 %v556, 2.4451342
    %v565 = vadd.f32 %v557, 2.4451342
    %v566 = vadd.f32 %v558, 2.4451342
    %v567 = vmul.f32 %v559, %v405
    %v568 = vmul.f32 %v560, %v412
    %v569 = vmul.f32 %v561, %v419
    %v570 = vmul.f32 %v562, %v426
    %v571 = vmul.f32 %v563, %v433
    %v572 = vmul.f32 %v564, %v440
    %v573 = vmul.f32 %v565, %v447
    %v574 = vmul.f32 %v566, %v454
    %v575 = vadd.f32 %v567, 3.7544086
    %v576 = vadd.f32 %v568, 3.7544086
    %v577 = vadd.f32 %v569, 3.7544086
    %v578 = vadd.f32 %v570, 3.7544086
    %v579 = vadd.f32 %v571, 3.7544086
    %v580 = vadd.f32 %v572, 3.7544086
    %v581 = vadd.f32 %v573, 3.7544086
    %v582 = vadd.f32 %v574, 3.7544086
    %v583 = vmul.f32 %v575, %v405
    %v584 = vmul.f32 %v576, %v412
    %v585 = vmul.f32 %v577, %v419
    %v586 = vmul.f32 %v578, %v426
    %v587 = vmul.f32 %v579, %v433
    %v588 = vmul.f32 %v580, %v440
    %v589 = vmul.f32 %v581, %v447
    %v590 = vmul.f32 %v582, %v454
    %v591 = vadd.f32 %v583, 1.0
    %v592 = vadd.f32 %v584, 1.0
    %v593 = vadd.f32 %v585, 1.0
    %v594 = vadd.f32 %v586, 1.0
    %v595 = vadd.f32 %v587, 1.0
    %v596 = vadd.f32 %v588, 1.0
    %v597 = vadd.f32 %v589, 1.0
    %v598 = vadd.f32 %v590, 1.0
    %vm599 = vcmp.lt.f32.partialorder %v175, 0.0
    %vm600 = vcmp.lt.f32.partialorder %v176, 0.0
    %vm601 = vcmp.lt.f32.partialorder %v177, 0.0
    %vm602 = vcmp.lt.f32.partialorder %v178, 0.0
    %vm603 = vcmp.lt.f32.partialorder %v179, 0.0
    %vm604 = vcmp.lt.f32.partialorder %v180, 0.0
    %vm605 = vcmp.lt.f32.partialorder %v181, 0.0
    %vm606 = vcmp.lt.f32.partialorder %v182, 0.0
    %v607 = vsel %vm599, 1.0, -1.0
    %v608 = vsel %vm600, 1.0, -1.0
    %v609 = vsel %vm601, 1.0, -1.0
    %v610 = vsel %vm602, 1.0, -1.0
    %v611 = vsel %vm603, 1.0, -1.0
    %v612 = vsel %vm604, 1.0, -1.0
    %v613 = vsel %vm605, 1.0, -1.0
    %v614 = vsel %vm606, 1.0, -1.0
    %vm615 = vcmp.ge.f32.partialorder %v367, 0.02425
    %vm616 = vcmp.ge.f32.partialorder %v368, 0.02425
    %vm617 = vcmp.ge.f32.partialorder %v369, 0.02425
    %vm618 = vcmp.ge.f32.partialorder %v370, 0.02425
    %vm619 = vcmp.ge.f32.partialorder %v371, 0.02425
    %vm620 = vcmp.ge.f32.partialorder %v372, 0.02425
    %vm621 = vcmp.ge.f32.partialorder %v373, 0.02425
    %vm622 = vcmp.ge.f32.partialorder %v374, 0.02425
    %v623 = vmul.f32 %v607, %v527
    %v624 = vmul.f32 %v608, %v528
    %v625 = vmul.f32 %v609, %v529
    %v626 = vmul.f32 %v610, %v530
    %v627 = vmul.f32 %v611, %v531
    %v628 = vmul.f32 %v612, %v532
    %v629 = vmul.f32 %v613, %v533
    %v630 = vmul.f32 %v614, %v534
    %v631 = vsel %vm615, %v271, %v623
    %v632 = vsel %vm616, %v272, %v624
    %v633 = vsel %vm617, %v273, %v625
    %v634 = vsel %vm618, %v274, %v626
    %v635 = vsel %vm619, %v275, %v627
    %v636 = vsel %vm620, %v276, %v628
    %v637 = vsel %vm621, %v277, %v629
    %v638 = vsel %vm622, %v278, %v630
    %v639 = vsel %vm615, %v351, %v591
    %v640 = vsel %vm616, %v352, %v592
    %v641 = vsel %vm617, %v353, %v593
    %v642 = vsel %vm618, %v354, %v594
    %v643 = vsel %vm619, %v355, %v595
    %v644 = vsel %vm620, %v356, %v596
    %v645 = vsel %vm621, %v357, %v597
    %v646 = vsel %vm622, %v358, %v598
    %v647 = vrcp.pop %v639
    %v648 = vmul.f32 %v631, %v647
    %v649 = vrcp.pop %v640
    %v650 = vmul.f32 %v632, %v649
    %v651 = vrcp.pop %v641
    %v652 = vmul.f32 %v633, %v651
    %v653 = vrcp.pop %v642
    %v654 = vmul.f32 %v634, %v653
    %v655 = vrcp.pop %v643
    %v656 = vmul.f32 %v635, %v655
    %v657 = vrcp.pop %v644
    %v658 = vmul.f32 %v636, %v657
    %v659 = vrcp.pop %v645
    %v660 = vmul.f32 %v637, %v659
    %v661 = vrcp.pop %v646
    %v662 = vmul.f32 %v638, %v661
    %s663 = sld [smem:[#allocation3]]
    %v664 = vstv %s663
    %v665 = vmul.f32 %v664, %v648
    %v666 = vmul.f32 %v664, %v650
    %v667 = vmul.f32 %v664, %v652
    %v668 = vmul.f32 %v664, %v654
    %v669 = vmul.f32 %v664, %v656
    %v670 = vmul.f32 %v664, %v658
    %v671 = vmul.f32 %v664, %v660
    %v672 = vmul.f32 %v664, %v662
    %v673 = vld [vmem:[#allocation4] sm:$0xff]
    %v674 = vld [vmem:[#allocation4 + $0x8] sm:$0xff]
    %v675 = vld [vmem:[#allocation4 + $0x10] sm:$0xff]
    %v676 = vld [vmem:[#allocation4 + $0x18] sm:$0xff]
    %v677 = vld [vmem:[#allocation4 + $0x20] sm:$0xff]
    %v678 = vld [vmem:[#allocation4 + $0x28] sm:$0xff]
    %v679 = vld [vmem:[#allocation4 + $0x30] sm:$0xff]
    %v680 = vld [vmem:[#allocation4 + $0x38] sm:$0xff]
    %v681 = vadd.f32 %v673, %v665
    %v682 = vadd.f32 %v674, %v666
    %v683 = vadd.f32 %v675, %v667
    %v684 = vadd.f32 %v676, %v668
    %v685 = vadd.f32 %v677, %v669
    %v686 = vadd.f32 %v678, %v670
    %v687 = vadd.f32 %v679, %v671
    %v688 = vadd.f32 %v680, %v672
    %689 = vst [vmem:[#allocation7] sm:$0xff] %v681
    %690 = vst [vmem:[#allocation7 + $0x8] sm:$0xff] %v682
    %691 = vst [vmem:[#allocation7 + $0x10] sm:$0xff] %v683
    %692 = vst [vmem:[#allocation7 + $0x18] sm:$0xff] %v684
    %693 = vst [vmem:[#allocation7 + $0x20] sm:$0xff] %v685
    %694 = vst [vmem:[#allocation7 + $0x28] sm:$0xff] %v686
    %695 = vst [vmem:[#allocation7 + $0x30] sm:$0xff] %v687
    %696 = vst [vmem:[#allocation7 + $0x38] sm:$0xff] %v688
    // Predicated region
    $region18: #{tpu_custom_call.1} parent=1 // pred_check
      _
    $region19: #{tpu_custom_call.1} parent=1 // pred_check_branch
      %698 = sbr.rel (0) target = $region21
    $region20: #{tpu_custom_call.1} parent=1 // pred_region
      %s700 = ssub.s32 1024, 1024
      %701 = vsyncadd [#allocation6], %s700
      %s703 = sshll.u32 [#allocation7], 4
      %s704 = int_to_ptr.vmem [resolvable:$true] %s703
      %706 = dma.vmem_to_hbm [thread:$0]  %s704, 1024, %s3, [#allocation6]
    $region21: #{tpu_custom_call.1} parent=1 // pred_fallthru
      _
    // Predicated region
    $region22: #{tpu_custom_call.1} parent=1 // pred_check
      _
    $region23: #{tpu_custom_call.1} parent=1 // pred_check_branch
      %708 = sbr.rel (0) target = $region25
    $region24: #{tpu_custom_call.1} parent=1 // pred_region
      %709 = dma.done [#allocation6], 1024
    $region25: #{tpu_custom_call.1} parent=1 // pred_fallthru
      _
    %710 = vsyncpa [#allocation5], 1
    %711 = vsyncpa [#allocation6], 1

</llo_original>
